<compile_context>
chip_gen: v5e
topology: v5e:2x2
jax: 0.10.0
libtpu: 0.0.40
codegen_flags: <defaults>
</compile_context>

<pallas_src>
import functools

import numpy as np
import jax
import jax.numpy as jnp
from jax.experimental import pallas as pl
from jax.experimental.pallas import tpu as pltpu

BN_EPS = 1e-5


def _output_cv_block_kernel(x_ref, mask_ref, w1_ref, w2_ref, gamma_ref,
                            beta_ref, o_ref, *, n, h, w, cin, cout):
    hw = h * w                     # lanes per image
    ns = n * hw                    # flattened (n, h, w) lane extent
    pad = 128                      # >= w + 1; keeps the pad-concat lane aligned

    def im2col(act):
        """act: (cin, ns) f32 -> (9*cin, ns) bf16 im2col slab.

        Tap (ky, kx) needs `act` shifted by off = (ky-1)*w + (kx-1) along the
        flattened (n, h, w) axis plus SAME zero padding at the h/w edges.  The
        shift is a static lane slice of a zero-padded copy; edge zeroing is a
        precomputed {0,1} mask (built in the wrapper), so the kernel needs no
        iota / integer div-mod and no VMEM patch scratch.
        """
        zeros = jnp.zeros((cin, pad), jnp.float32)
        padded = jnp.concatenate([zeros, act, zeros], axis=1)   # (cin, ns+2*pad)
        pieces = []
        for ky in range(3):
            for kx in range(3):
                k = ky * 3 + kx
                off = (ky - 1) * w + (kx - 1)
                shifted = jax.lax.slice(padded, (0, pad + off),
                                        (cin, pad + off + ns))   # (cin, ns)
                pieces.append(shifted * mask_ref[k:k + 1, :])
        return jnp.concatenate(pieces, axis=0).astype(jnp.bfloat16)

    # Flatten the batch onto the lane axis (still channel-first: lane = b*hw + s).
    x_all = jnp.concatenate([x_ref[b] for b in range(n)], axis=1)    # (cin, ns) f32

    # ---- Conv1: one im2col MXU matmul, bf16 operands, f32 accumulation ----
    z = jnp.dot(w1_ref[...], im2col(x_all),
                preferred_element_type=jnp.float32)                  # (cin, ns)

    # ---- BatchNorm2d (training-mode batch statistics), two-pass mean/var ----
    inv_cnt = 1.0 / float(ns)
    mean = jnp.sum(z, axis=1, keepdims=True) * inv_cnt               # (cin, 1)
    centered = z - mean
    var = jnp.sum(centered * centered, axis=1, keepdims=True) * inv_cnt
    scale = gamma_ref[...] * jax.lax.rsqrt(var + BN_EPS)             # (cin, 1)

    # ---- ReLU ----
    y = jnp.maximum(centered * scale + beta_ref[...], 0.0)           # (cin, ns) f32

    # ---- Conv2: one im2col MXU matmul ----
    out = jnp.dot(w2_ref[...], im2col(y),
                  preferred_element_type=jnp.float32)                # (co_pad, ns)

    # Lane-dense stores: (cout, hw) = (cout, 256) per image.
    for b in range(n):
        o_ref[b] = out[:cout, b * hw:(b + 1) * hw]


def _edge_masks(n, h, w):
    """(9, n*h*w) {0,1} masks implementing SAME zero padding for each 3x3 tap
    over the flattened (n, h, w) lane axis.  Pure compile-time constant."""
    s = np.arange(n * h * w)
    hh = (s % (h * w)) // w
    ww = s % w
    masks = np.empty((9, n * h * w), np.float32)
    for ky in range(3):
        for kx in range(3):
            dy, dx = ky - 1, kx - 1
            valid = ((hh + dy >= 0) & (hh + dy < h) &
                     (ww + dx >= 0) & (ww + dx < w))
            masks[ky * 3 + kx] = valid.astype(np.float32)
    return jnp.asarray(masks)


@jax.jit
def output_cv_block(x_nchw, w1_hwio, w2_hwio, gamma, beta):
    """x_nchw: (N, Cin, H, W); w*_hwio: (3, 3, Cin, C*); gamma/beta: (Cin,)."""
    N, Cin, H, W = x_nchw.shape
    Cout = w2_hwio.shape[-1]
    S = H * W
    NS = N * S
    K = 9 * Cin
    co_pad = max(8, -(-Cout // 8) * 8)          # pad matmul M-dim up to >= 8 rows

    # Free reshape only (contiguous dim merge) -- no transpose HBM round trip.
    x_flat = x_nchw.reshape(N, Cin, S).astype(jnp.float32)

    # Dense im2col weights (C*, 9*Cin), bf16 for the MXU; tap ordering matches im2col().
    w1_mat = jnp.transpose(w1_hwio, (3, 0, 1, 2)).reshape(Cin, K).astype(jnp.bfloat16)
    w2_mat = jnp.transpose(w2_hwio, (3, 0, 1, 2)).reshape(Cout, K)
    w2_mat = jnp.pad(w2_mat, ((0, co_pad - Cout), (0, 0))).astype(jnp.bfloat16)

    gamma_c = gamma.reshape(Cin, 1).astype(jnp.float32)
    beta_c = beta.reshape(Cin, 1).astype(jnp.float32)
    masks = _edge_masks(N, H, W)

    kernel = functools.partial(_output_cv_block_kernel,
                               n=N, h=H, w=W, cin=Cin, cout=Cout)

    flops = 2 * NS * K * (Cin + Cout)
    bytes_accessed = (4 * N * Cin * S + 4 * 9 * NS + 2 * Cin * K +
                      2 * co_pad * K + 4 * 2 * Cin + 4 * N * Cout * S)

    # Single grid point: the whole problem (tens of KiB) lives in VMEM.
    # TODO(synk): at realistic sizes, tile (N, H) rows with a grid, split BN into
    # an accumulate pass + normalize pass, use dimension_semantics=("parallel",
    # ..., "arbitrary") for megacore/v7x, keep weights resident via constant
    # index_maps, and budget vmem_limit_bytes for v7x's 64 MiB VMEM.
    out = pl.pallas_call(
        kernel,
        out_shape=jax.ShapeDtypeStruct((N, Cout, S), jnp.float32),
        in_specs=[pl.BlockSpec(memory_space=pltpu.MemorySpace.VMEM)] * 6,
        out_specs=pl.BlockSpec(memory_space=pltpu.MemorySpace.VMEM),
        cost_estimate=pl.CostEstimate(flops=flops, transcendentals=Cin,
                                      bytes_accessed=bytes_accessed),
        compiler_params=pltpu.CompilerParams(vmem_limit_bytes=32 * 1024 * 1024),
    )(x_flat, masks, w1_mat, w2_mat, gamma_c, beta_c)

    # (N, Cout, H*W) -> (N, Cout, H, W): free reshape, already channel-first.
    return out.reshape(N, Cout, H, W)


def _reference(x_nchw, w1_hwio, w2_hwio, gamma, beta):
    """Pure-JAX reference matching the PyTorch forward (training-mode BN)."""
    x = jnp.transpose(x_nchw, (0, 2, 3, 1)).astype(jnp.float32)
    dn = ('NHWC', 'HWIO', 'NHWC')
    y = jax.lax.conv_general_dilated(x, w1_hwio, (1, 1), 'SAME',
                                     dimension_numbers=dn)
    mean = jnp.mean(y, axis=(0, 1, 2))
    var = jnp.mean((y - mean) ** 2, axis=(0, 1, 2))
    y = (y - mean) * jax.lax.rsqrt(var + BN_EPS) * gamma + beta
    y = jnp.maximum(y, 0.0)
    y = jax.lax.conv_general_dilated(y, w2_hwio, (1, 1), 'SAME',
                                     dimension_numbers=dn)
    return jnp.transpose(y, (0, 3, 1, 2))


if __name__ == "__main__":
    # Small shapes consistent with the module: N=2, in_ch=8, out_ch=4, H=W=16.
    N, Cin, Cout, H, W = 2, 8, 4, 16, 16

    key = jax.random.PRNGKey(0)
    kx, kw1, kw2, kg, kb = jax.random.split(key, 5)

    x = jax.random.normal(kx, (N, Cin, H, W), jnp.float32)
    # Conv weights stored HWIO (kh, kw, in, out); PyTorch OIHW -> transpose(2,3,1,0).
    w1 = jax.random.normal(kw1, (3, 3, Cin, Cin), jnp.float32) * 0.1
    w2 = jax.random.normal(kw2, (3, 3, Cin, Cout), jnp.float32) * 0.1
    # BatchNorm affine params (randomized to exercise the scale/shift path).
    gamma = 1.0 + 0.1 * jax.random.normal(kg, (Cin,), jnp.float32)
    beta = 0.1 * jax.random.normal(kb, (Cin,), jnp.float32)

    out = jax.block_until_ready(output_cv_block(x, w1, w2, gamma, beta))
    ref = _reference(x, w1, w2, gamma, beta)

    assert out.shape == (N, Cout, H, W), out.shape
    # bf16 MXU operands (f32 accumulation / f32 BN stats) -> looser tolerance.
    assert jnp.allclose(out, ref, rtol=5e-2, atol=5e-2), (
        float(jnp.max(jnp.abs(out - ref))))

    print("KERNEL_OK")
</pallas_src>

<mosaic_0001>
module attributes {stable_mosaic.version = 11 : i64} {
  func.func @_output_cv_block_kernel(%arg0: memref<2x8x256xf32, #tpu.memory_space<vmem>>, %arg1: memref<9x512xf32, #tpu.memory_space<vmem>>, %arg2: memref<8x72xbf16, #tpu.memory_space<vmem>>, %arg3: memref<8x72xbf16, #tpu.memory_space<vmem>>, %arg4: memref<8x1xf32, #tpu.memory_space<vmem>>, %arg5: memref<8x1xf32, #tpu.memory_space<vmem>>, %arg6: memref<2x4x256xf32, #tpu.memory_space<vmem>>) attributes {dimension_semantics = [], scalar_prefetch = 0 : i64, scratch_operands = 0 : i64, tpu.core_type = #tpu.core_type<tc>} {
    %c0 = arith.constant 0 : index
    %c0_0 = arith.constant 0 : index
    %c0_1 = arith.constant 0 : index
    %0 = vector.load %arg0[%c0, %c0_0, %c0_1] : memref<2x8x256xf32, #tpu.memory_space<vmem>>, vector<1x8x256xf32>
    %1 = vector.shape_cast %0 : vector<1x8x256xf32> to vector<8x256xf32>
    %c1 = arith.constant 1 : index
    %c0_2 = arith.constant 0 : index
    %c0_3 = arith.constant 0 : index
    %2 = vector.load %arg0[%c1, %c0_2, %c0_3] : memref<2x8x256xf32, #tpu.memory_space<vmem>>, vector<1x8x256xf32>
    %3 = vector.shape_cast %2 : vector<1x8x256xf32> to vector<8x256xf32>
    %4 = tpu.concatenate %1, %3 in 1 : vector<8x256xf32>, vector<8x256xf32> -> vector<8x512xf32>
    %c0_4 = arith.constant 0 : index
    %c0_5 = arith.constant 0 : index
    %5 = vector.load %arg2[%c0_4, %c0_5] : memref<8x72xbf16, #tpu.memory_space<vmem>>, vector<8x72xbf16>
    %cst = arith.constant 0.000000e+00 : f32
    %6 = vector.broadcast %cst : f32 to vector<8x128xf32>
    %7 = tpu.concatenate %6, %4, %6 in 1 : vector<8x128xf32>, vector<8x512xf32>, vector<8x128xf32> -> vector<8x768xf32>
    %8 = vector.extract_strided_slice %7 {offsets = [0, 111], sizes = [8, 512], strides = [1, 1]} : vector<8x768xf32> to vector<8x512xf32>
    %c0_6 = arith.constant 0 : index
    %c0_7 = arith.constant 0 : index
    %9 = vector.load %arg1[%c0_6, %c0_7] : memref<9x512xf32, #tpu.memory_space<vmem>>, vector<1x512xf32>
    %10 = vector.broadcast %9 : vector<1x512xf32> to vector<8x512xf32>
    %11 = arith.mulf %8, %10 : vector<8x512xf32>
    %12 = vector.extract_strided_slice %7 {offsets = [0, 112], sizes = [8, 512], strides = [1, 1]} : vector<8x768xf32> to vector<8x512xf32>
    %c1_8 = arith.constant 1 : index
    %c0_9 = arith.constant 0 : index
    %13 = vector.load %arg1[%c1_8, %c0_9] : memref<9x512xf32, #tpu.memory_space<vmem>>, vector<1x512xf32>
    %14 = vector.broadcast %13 : vector<1x512xf32> to vector<8x512xf32>
    %15 = arith.mulf %12, %14 : vector<8x512xf32>
    %16 = vector.extract_strided_slice %7 {offsets = [0, 113], sizes = [8, 512], strides = [1, 1]} : vector<8x768xf32> to vector<8x512xf32>
    %c2 = arith.constant 2 : index
    %c0_10 = arith.constant 0 : index
    %17 = vector.load %arg1[%c2, %c0_10] : memref<9x512xf32, #tpu.memory_space<vmem>>, vector<1x512xf32>
    %18 = vector.broadcast %17 : vector<1x512xf32> to vector<8x512xf32>
    %19 = arith.mulf %16, %18 : vector<8x512xf32>
    %20 = vector.extract_strided_slice %7 {offsets = [0, 127], sizes = [8, 512], strides = [1, 1]} : vector<8x768xf32> to vector<8x512xf32>
    %c3 = arith.constant 3 : index
    %c0_11 = arith.constant 0 : index
    %21 = vector.load %arg1[%c3, %c0_11] : memref<9x512xf32, #tpu.memory_space<vmem>>, vector<1x512xf32>
    %22 = vector.broadcast %21 : vector<1x512xf32> to vector<8x512xf32>
    %23 = arith.mulf %20, %22 : vector<8x512xf32>
    %24 = vector.extract_strided_slice %7 {offsets = [0, 128], sizes = [8, 512], strides = [1, 1]} : vector<8x768xf32> to vector<8x512xf32>
    %c4 = arith.constant 4 : index
    %c0_12 = arith.constant 0 : index
    %25 = vector.load %arg1[%c4, %c0_12] : memref<9x512xf32, #tpu.memory_space<vmem>>, vector<1x512xf32>
    %26 = vector.broadcast %25 : vector<1x512xf32> to vector<8x512xf32>
    %27 = arith.mulf %24, %26 : vector<8x512xf32>
    %28 = vector.extract_strided_slice %7 {offsets = [0, 129], sizes = [8, 512], strides = [1, 1]} : vector<8x768xf32> to vector<8x512xf32>
    %c5 = arith.constant 5 : index
    %c0_13 = arith.constant 0 : index
    %29 = vector.load %arg1[%c5, %c0_13] : memref<9x512xf32, #tpu.memory_space<vmem>>, vector<1x512xf32>
    %30 = vector.broadcast %29 : vector<1x512xf32> to vector<8x512xf32>
    %31 = arith.mulf %28, %30 : vector<8x512xf32>
    %32 = vector.extract_strided_slice %7 {offsets = [0, 143], sizes = [8, 512], strides = [1, 1]} : vector<8x768xf32> to vector<8x512xf32>
    %c6 = arith.constant 6 : index
    %c0_14 = arith.constant 0 : index
    %33 = vector.load %arg1[%c6, %c0_14] : memref<9x512xf32, #tpu.memory_space<vmem>>, vector<1x512xf32>
    %34 = vector.broadcast %33 : vector<1x512xf32> to vector<8x512xf32>
    %35 = arith.mulf %32, %34 : vector<8x512xf32>
    %36 = vector.extract_strided_slice %7 {offsets = [0, 144], sizes = [8, 512], strides = [1, 1]} : vector<8x768xf32> to vector<8x512xf32>
    %c7 = arith.constant 7 : index
    %c0_15 = arith.constant 0 : index
    %37 = vector.load %arg1[%c7, %c0_15] : memref<9x512xf32, #tpu.memory_space<vmem>>, vector<1x512xf32>
    %38 = vector.broadcast %37 : vector<1x512xf32> to vector<8x512xf32>
    %39 = arith.mulf %36, %38 : vector<8x512xf32>
    %40 = vector.extract_strided_slice %7 {offsets = [0, 145], sizes = [8, 512], strides = [1, 1]} : vector<8x768xf32> to vector<8x512xf32>
    %c8 = arith.constant 8 : index
    %c0_16 = arith.constant 0 : index
    %41 = vector.load %arg1[%c8, %c0_16] : memref<9x512xf32, #tpu.memory_space<vmem>>, vector<1x512xf32>
    %42 = vector.broadcast %41 : vector<1x512xf32> to vector<8x512xf32>
    %43 = arith.mulf %40, %42 : vector<8x512xf32>
    %44 = tpu.concatenate %11, %15, %19, %23, %27, %31, %35, %39, %43 in 0 : vector<8x512xf32>, vector<8x512xf32>, vector<8x512xf32>, vector<8x512xf32>, vector<8x512xf32>, vector<8x512xf32>, vector<8x512xf32>, vector<8x512xf32>, vector<8x512xf32> -> vector<72x512xf32>
    %45 = arith.truncf %44 : vector<72x512xf32> to vector<72x512xbf16>
    %cst_17 = arith.constant dense<0.000000e+00> : vector<8x512xf32>
    %46 = tpu.matmul %5, %45, %cst_17 {dimension_numbers = #tpu.dot_dimension_numbers<[1], [0], [0], [1], [0, 0, 1, 1], [], []>} : vector<8x72xbf16>, vector<72x512xbf16>, vector<8x512xf32> -> vector<8x512xf32>
    %cst_18 = arith.constant dense<0.000000e+00> : vector<8xf32>
    %47 = vector.multi_reduction <add>, %46, %cst_18 [1] : vector<8x512xf32> to vector<8xf32>
    %48 = vector.shape_cast %47 : vector<8xf32> to vector<8x1xf32>
    %cst_19 = arith.constant 0.001953125 : f32
    %49 = vector.broadcast %cst_19 : f32 to vector<8x1xf32>
    %50 = arith.mulf %48, %49 : vector<8x1xf32>
    %51 = vector.broadcast %50 : vector<8x1xf32> to vector<8x512xf32>
    %52 = arith.subf %46, %51 : vector<8x512xf32>
    %53 = arith.mulf %52, %52 : vector<8x512xf32>
    %cst_20 = arith.constant dense<0.000000e+00> : vector<8xf32>
    %54 = vector.multi_reduction <add>, %53, %cst_20 [1] : vector<8x512xf32> to vector<8xf32>
    %55 = vector.shape_cast %54 : vector<8xf32> to vector<8x1xf32>
    %cst_21 = arith.constant 0.001953125 : f32
    %56 = vector.broadcast %cst_21 : f32 to vector<8x1xf32>
    %57 = arith.mulf %55, %56 : vector<8x1xf32>
    %c0_22 = arith.constant 0 : index
    %c0_23 = arith.constant 0 : index
    %58 = vector.load %arg4[%c0_22, %c0_23] : memref<8x1xf32, #tpu.memory_space<vmem>>, vector<8x1xf32>
    %cst_24 = arith.constant 9.99999974E-6 : f32
    %59 = vector.broadcast %cst_24 : f32 to vector<8x1xf32>
    %60 = arith.addf %57, %59 : vector<8x1xf32>
    %61 = math.rsqrt %60 : vector<8x1xf32>
    %62 = arith.mulf %58, %61 : vector<8x1xf32>
    %63 = vector.broadcast %62 : vector<8x1xf32> to vector<8x512xf32>
    %64 = arith.mulf %52, %63 : vector<8x512xf32>
    %c0_25 = arith.constant 0 : index
    %c0_26 = arith.constant 0 : index
    %65 = vector.load %arg5[%c0_25, %c0_26] : memref<8x1xf32, #tpu.memory_space<vmem>>, vector<8x1xf32>
    %66 = vector.broadcast %65 : vector<8x1xf32> to vector<8x512xf32>
    %67 = arith.addf %64, %66 : vector<8x512xf32>
    %cst_27 = arith.constant 0.000000e+00 : f32
    %68 = vector.broadcast %cst_27 : f32 to vector<8x512xf32>
    %69 = arith.maximumf %67, %68 : vector<8x512xf32>
    %c0_28 = arith.constant 0 : index
    %c0_29 = arith.constant 0 : index
    %70 = vector.load %arg3[%c0_28, %c0_29] : memref<8x72xbf16, #tpu.memory_space<vmem>>, vector<8x72xbf16>
    %cst_30 = arith.constant 0.000000e+00 : f32
    %71 = vector.broadcast %cst_30 : f32 to vector<8x128xf32>
    %72 = tpu.concatenate %71, %69, %71 in 1 : vector<8x128xf32>, vector<8x512xf32>, vector<8x128xf32> -> vector<8x768xf32>
    %73 = vector.extract_strided_slice %72 {offsets = [0, 111], sizes = [8, 512], strides = [1, 1]} : vector<8x768xf32> to vector<8x512xf32>
    %c0_31 = arith.constant 0 : index
    %c0_32 = arith.constant 0 : index
    %74 = vector.load %arg1[%c0_31, %c0_32] : memref<9x512xf32, #tpu.memory_space<vmem>>, vector<1x512xf32>
    %75 = vector.broadcast %74 : vector<1x512xf32> to vector<8x512xf32>
    %76 = arith.mulf %73, %75 : vector<8x512xf32>
    %77 = vector.extract_strided_slice %72 {offsets = [0, 112], sizes = [8, 512], strides = [1, 1]} : vector<8x768xf32> to vector<8x512xf32>
    %c1_33 = arith.constant 1 : index
    %c0_34 = arith.constant 0 : index
    %78 = vector.load %arg1[%c1_33, %c0_34] : memref<9x512xf32, #tpu.memory_space<vmem>>, vector<1x512xf32>
    %79 = vector.broadcast %78 : vector<1x512xf32> to vector<8x512xf32>
    %80 = arith.mulf %77, %79 : vector<8x512xf32>
    %81 = vector.extract_strided_slice %72 {offsets = [0, 113], sizes = [8, 512], strides = [1, 1]} : vector<8x768xf32> to vector<8x512xf32>
    %c2_35 = arith.constant 2 : index
    %c0_36 = arith.constant 0 : index
    %82 = vector.load %arg1[%c2_35, %c0_36] : memref<9x512xf32, #tpu.memory_space<vmem>>, vector<1x512xf32>
    %83 = vector.broadcast %82 : vector<1x512xf32> to vector<8x512xf32>
    %84 = arith.mulf %81, %83 : vector<8x512xf32>
    %85 = vector.extract_strided_slice %72 {offsets = [0, 127], sizes = [8, 512], strides = [1, 1]} : vector<8x768xf32> to vector<8x512xf32>
    %c3_37 = arith.constant 3 : index
    %c0_38 = arith.constant 0 : index
    %86 = vector.load %arg1[%c3_37, %c0_38] : memref<9x512xf32, #tpu.memory_space<vmem>>, vector<1x512xf32>
    %87 = vector.broadcast %86 : vector<1x512xf32> to vector<8x512xf32>
    %88 = arith.mulf %85, %87 : vector<8x512xf32>
    %89 = vector.extract_strided_slice %72 {offsets = [0, 128], sizes = [8, 512], strides = [1, 1]} : vector<8x768xf32> to vector<8x512xf32>
    %c4_39 = arith.constant 4 : index
    %c0_40 = arith.constant 0 : index
    %90 = vector.load %arg1[%c4_39, %c0_40] : memref<9x512xf32, #tpu.memory_space<vmem>>, vector<1x512xf32>
    %91 = vector.broadcast %90 : vector<1x512xf32> to vector<8x512xf32>
    %92 = arith.mulf %89, %91 : vector<8x512xf32>
    %93 = vector.extract_strided_slice %72 {offsets = [0, 129], sizes = [8, 512], strides = [1, 1]} : vector<8x768xf32> to vector<8x512xf32>
    %c5_41 = arith.constant 5 : index
    %c0_42 = arith.constant 0 : index
    %94 = vector.load %arg1[%c5_41, %c0_42] : memref<9x512xf32, #tpu.memory_space<vmem>>, vector<1x512xf32>
    %95 = vector.broadcast %94 : vector<1x512xf32> to vector<8x512xf32>
    %96 = arith.mulf %93, %95 : vector<8x512xf32>
    %97 = vector.extract_strided_slice %72 {offsets = [0, 143], sizes = [8, 512], strides = [1, 1]} : vector<8x768xf32> to vector<8x512xf32>
    %c6_43 = arith.constant 6 : index
    %c0_44 = arith.constant 0 : index
    %98 = vector.load %arg1[%c6_43, %c0_44] : memref<9x512xf32, #tpu.memory_space<vmem>>, vector<1x512xf32>
    %99 = vector.broadcast %98 : vector<1x512xf32> to vector<8x512xf32>
    %100 = arith.mulf %97, %99 : vector<8x512xf32>
    %101 = vector.extract_strided_slice %72 {offsets = [0, 144], sizes = [8, 512], strides = [1, 1]} : vector<8x768xf32> to vector<8x512xf32>
    %c7_45 = arith.constant 7 : index
    %c0_46 = arith.constant 0 : index
    %102 = vector.load %arg1[%c7_45, %c0_46] : memref<9x512xf32, #tpu.memory_space<vmem>>, vector<1x512xf32>
    %103 = vector.broadcast %102 : vector<1x512xf32> to vector<8x512xf32>
    %104 = arith.mulf %101, %103 : vector<8x512xf32>
    %105 = vector.extract_strided_slice %72 {offsets = [0, 145], sizes = [8, 512], strides = [1, 1]} : vector<8x768xf32> to vector<8x512xf32>
    %c8_47 = arith.constant 8 : index
    %c0_48 = arith.constant 0 : index
    %106 = vector.load %arg1[%c8_47, %c0_48] : memref<9x512xf32, #tpu.memory_space<vmem>>, vector<1x512xf32>
    %107 = vector.broadcast %106 : vector<1x512xf32> to vector<8x512xf32>
    %108 = arith.mulf %105, %107 : vector<8x512xf32>
    %109 = tpu.concatenate %76, %80, %84, %88, %92, %96, %100, %104, %108 in 0 : vector<8x512xf32>, vector<8x512xf32>, vector<8x512xf32>, vector<8x512xf32>, vector<8x512xf32>, vector<8x512xf32>, vector<8x512xf32>, vector<8x512xf32>, vector<8x512xf32> -> vector<72x512xf32>
    %110 = arith.truncf %109 : vector<72x512xf32> to vector<72x512xbf16>
    %cst_49 = arith.constant dense<0.000000e+00> : vector<8x512xf32>
    %111 = tpu.matmul %70, %110, %cst_49 {dimension_numbers = #tpu.dot_dimension_numbers<[1], [0], [0], [1], [0, 0, 1, 1], [], []>} : vector<8x72xbf16>, vector<72x512xbf16>, vector<8x512xf32> -> vector<8x512xf32>
    %112 = vector.extract_strided_slice %111 {offsets = [0, 0], sizes = [4, 256], strides = [1, 1]} : vector<8x512xf32> to vector<4x256xf32>
    %c0_50 = arith.constant 0 : index
    %c0_51 = arith.constant 0 : index
    %c0_52 = arith.constant 0 : index
    %113 = vector.load %arg6[%c0_50, %c0_51, %c0_52] : memref<2x4x256xf32, #tpu.memory_space<vmem>>, vector<1x4x256xf32>
    %114 = vector.shape_cast %113 : vector<1x4x256xf32> to vector<4x256xf32>
    %115 = vector.shape_cast %112 : vector<4x256xf32> to vector<1x4x256xf32>
    tpu.vector_store %arg6[%c0_50, %c0_51, %c0_52], %115 {strides = array<i32>} : memref<2x4x256xf32, #tpu.memory_space<vmem>>, vector<1x4x256xf32>,
    %116 = vector.extract_strided_slice %111 {offsets = [0, 256], sizes = [4, 256], strides = [1, 1]} : vector<8x512xf32> to vector<4x256xf32>
    %c1_53 = arith.constant 1 : index
    %c0_54 = arith.constant 0 : index
    %c0_55 = arith.constant 0 : index
    %117 = vector.load %arg6[%c1_53, %c0_54, %c0_55] : memref<2x4x256xf32, #tpu.memory_space<vmem>>, vector<1x4x256xf32>
    %118 = vector.shape_cast %117 : vector<1x4x256xf32> to vector<4x256xf32>
    %119 = vector.shape_cast %116 : vector<4x256xf32> to vector<1x4x256xf32>
    tpu.vector_store %arg6[%c1_53, %c0_54, %c0_55], %119 {strides = array<i32>} : memref<2x4x256xf32, #tpu.memory_space<vmem>>, vector<1x4x256xf32>,
    return
  }
}

</mosaic_0001>

<llo_original>
// kernel: output_cv_block.1
$region0: #{output_cv_block.1}
  #allocation0 [shape = 'u32[]', space=smem, size = 0x4, offset = 0x4, fixed_abs, tag = 'smem constant byte address 0x4 - core index']
  #allocation1 [shape = 'u32[72,128]{1,0:T(1,128)}', space=vmem, size = 0x9000, scoped, tag = 'internal scratch']
  %s0 = inlined_call_operand.vmem [shape: f32[2,8,256], index: 0, kind: input, shape index: {}]
  %s1 = inlined_call_operand.vmem [shape: f32[9,512], index: 1, kind: input, shape index: {}]
  %s2 = inlined_call_operand.vmem [shape: bf16[8,72], index: 2, kind: input, shape index: {}]
  %s3 = inlined_call_operand.vmem [shape: bf16[8,72], index: 3, kind: input, shape index: {}]
  %s4 = inlined_call_operand.vmem [shape: f32[8,1], index: 4, kind: input, shape index: {}]
  %s5 = inlined_call_operand.vmem [shape: f32[8,1], index: 5, kind: input, shape index: {}]
  %s6 = inlined_call_operand.vmem [shape: f32[2,4,256], index: 6, kind: output, shape index: {}]
  %s7 = sld [smem:[#allocation0]]
  $region34: #{output_cv_block.1} parent=0
    _
  %s9 = ssub.s32 1, %s7
  %s10 = scalar_select 0, %s9, %s7
  // Predicated region
  $region2: #{output_cv_block.1} parent=0 // pred_check
    _
  $region3: #{output_cv_block.1} parent=0 // pred_check_branch
    %12 = sbr.rel (0) target = $region5
  $region4: #{output_cv_block.1} parent=0 // pred_region
    _
  $region5: #{output_cv_block.1} parent=0 // pred_fallthru
    _
  // Predicated region
  $region6: #{output_cv_block.1} parent=0 // pred_check
    _
  $region7: #{output_cv_block.1} parent=0 // pred_check_branch
    %14 = sbr.rel (0) target = $region9
  $region8: #{output_cv_block.1} parent=0 // pred_region
    _
  $region9: #{output_cv_block.1} parent=0 // pred_fallthru
    _
  // Predicated region
  $region10: #{output_cv_block.1} parent=0 // pred_check
    _
  $region11: #{output_cv_block.1} parent=0 // pred_check_branch
    %16 = sbr.rel (0) target = $region13
  $region12: #{output_cv_block.1} parent=0 // pred_region
    _
  $region13: #{output_cv_block.1} parent=0 // pred_fallthru
    _
  // Predicated region
  $region14: #{output_cv_block.1} parent=0 // pred_check
    _
  $region15: #{output_cv_block.1} parent=0 // pred_check_branch
    %18 = sbr.rel (0) target = $region17
  $region16: #{output_cv_block.1} parent=0 // pred_region
    _
  $region17: #{output_cv_block.1} parent=0 // pred_fallthru
    _
  // Predicated region
  $region18: #{output_cv_block.1} parent=0 // pred_check
    _
  $region19: #{output_cv_block.1} parent=0 // pred_check_branch
    %20 = sbr.rel (0) target = $region21
  $region20: #{output_cv_block.1} parent=0 // pred_region
    _
  $region21: #{output_cv_block.1} parent=0 // pred_fallthru
    _
  // Predicated region
  $region22: #{output_cv_block.1} parent=0 // pred_check
    _
  $region23: #{output_cv_block.1} parent=0 // pred_check_branch
    %22 = sbr.rel (0) target = $region25
  $region24: #{output_cv_block.1} parent=0 // pred_region
    _
  $region25: #{output_cv_block.1} parent=0 // pred_fallthru
    _
  %v24 = vld [vmem:[%s0] sm:$0xff]
  %v25 = vld [vmem:[%s0 + $0x8] sm:$0xff]
  %s26 = scalar_lea.vmem %s0, 16
  %v27 = vld [vmem:[%s26] sm:$0xff]
  %v28 = vld [vmem:[%s26 + $0x8] sm:$0xff]
  %v29 = vld [vmem:[%s2] sm:$0xf]
  %v30 = vld [vmem:[%s1] ss:$8 sm:$0xf]
  %v32 = vperm.slane %v30, 0
  %v33 = vperm.slane %v30, 1
  %v34 = vperm.slane %v30, 2
  %v35 = vperm.slane %v30, 3
  %36 = vrot.lane.b32.xlu0 %v32, 111
  %v37 = vpop.permute.xlu0 %36
  %38 = vrot.lane.b32.xlu0 %v33, 111
  %v39 = vpop.permute.xlu0 %38
  %40 = vrot.lane.b32.xlu0 %v34, 111
  %v41 = vpop.permute.xlu0 %40
  %42 = vrot.lane.b32.xlu0 %v35, 111
  %v43 = vpop.permute.xlu0 %42
  %vm44 = vcmask 908288
  %v45 = vsel %vm44, %v37, %v39
  %v46 = vsel %vm44, %v39, %v41
  %v47 = vsel %vm44, %v41, %v43
  %v53 = vmul.f32 %v37, 0.0
  %v54 = vmul.f32 %v24, %v45
  %v55 = vmul.f32 %v25, %v46
  %v56 = vmul.f32 %v27, %v47
  %v57 = vmul.f32 %v28, %v43
  %s58 = scalar_lea.vmem %s1, 1
  %v59 = vld [vmem:[%s58] ss:$8 sm:$0xf]
  %v61 = vperm.slane %v59, 0
  %v62 = vperm.slane %v59, 1
  %v63 = vperm.slane %v59, 2
  %v64 = vperm.slane %v59, 3
  %65 = vrot.lane.b32.xlu0 %v61, 112
  %v66 = vpop.permute.xlu0 %65
  %67 = vrot.lane.b32.xlu0 %v62, 112
  %v68 = vpop.permute.xlu0 %67
  %69 = vrot.lane.b32.xlu0 %v63, 112
  %v70 = vpop.permute.xlu0 %69
  %71 = vrot.lane.b32.xlu0 %v64, 112
  %v72 = vpop.permute.xlu0 %71
  %vm73 = vcmask 916480
  %v74 = vsel %vm73, %v66, %v68
  %v75 = vsel %vm73, %v68, %v70
  %v76 = vsel %vm73, %v70, %v72
  %v82 = vmul.f32 %v66, 0.0
  %v83 = vmul.f32 %v24, %v74
  %v84 = vmul.f32 %v25, %v75
  %v85 = vmul.f32 %v27, %v76
  %v86 = vmul.f32 %v28, %v72
  %s87 = scalar_lea.vmem %s1, 2
  %v88 = vld [vmem:[%s87] ss:$8 sm:$0xf]
  %v90 = vperm.slane %v88, 0
  %v91 = vperm.slane %v88, 1
  %v92 = vperm.slane %v88, 2
  %v93 = vperm.slane %v88, 3
  %94 = vrot.lane.b32.xlu0 %v90, 113
  %v95 = vpop.permute.xlu0 %94
  %96 = vrot.lane.b32.xlu0 %v91, 113
  %v97 = vpop.permute.xlu0 %96
  %98 = vrot.lane.b32.xlu0 %v92, 113
  %v99 = vpop.permute.xlu0 %98
  %100 = vrot.lane.b32.xlu0 %v93, 113
  %v101 = vpop.permute.xlu0 %100
  %vm102 = vcmask 924672
  %v103 = vsel %vm102, %v95, %v97
  %v104 = vsel %vm102, %v97, %v99
  %v105 = vsel %vm102, %v99, %v101
  %v111 = vmul.f32 %v95, 0.0
  %v112 = vmul.f32 %v24, %v103
  %v113 = vmul.f32 %v25, %v104
  %v114 = vmul.f32 %v27, %v105
  %v115 = vmul.f32 %v28, %v101
  %s116 = scalar_lea.vmem %s1, 3
  %v117 = vld [vmem:[%s116] ss:$8 sm:$0xf]
  %v119 = vperm.slane %v117, 0
  %v120 = vperm.slane %v117, 1
  %v121 = vperm.slane %v117, 2
  %v122 = vperm.slane %v117, 3
  %123 = vrot.lane.b32.xlu0 %v119, 127
  %v124 = vpop.permute.xlu0 %123
  %125 = vrot.lane.b32.xlu0 %v120, 127
  %v126 = vpop.permute.xlu0 %125
  %127 = vrot.lane.b32.xlu0 %v121, 127
  %v128 = vpop.permute.xlu0 %127
  %129 = vrot.lane.b32.xlu0 %v122, 127
  %v130 = vpop.permute.xlu0 %129
  %vm131 = vcmask 1039360
  %v132 = vsel %vm131, %v124, %v126
  %v133 = vsel %vm131, %v126, %v128
  %v134 = vsel %vm131, %v128, %v130
  %v140 = vmul.f32 %v124, 0.0
  %v141 = vmul.f32 %v24, %v132
  %v142 = vmul.f32 %v25, %v133
  %v143 = vmul.f32 %v27, %v134
  %v144 = vmul.f32 %v28, %v130
  %s145 = scalar_lea.vmem %s1, 4
  %v146 = vld [vmem:[%s145] ss:$8 sm:$0xf]
  %v148 = vperm.slane %v146, 0
  %v149 = vperm.slane %v146, 1
  %v150 = vperm.slane %v146, 2
  %v151 = vperm.slane %v146, 3
  %v156 = vmul.f32 %v24, %v148
  %v157 = vmul.f32 %v25, %v149
  %v158 = vmul.f32 %v27, %v150
  %v159 = vmul.f32 %v28, %v151
  %s160 = scalar_lea.vmem %s1, 5
  %v161 = vld [vmem:[%s160] ss:$8 sm:$0xf]
  %v163 = vperm.slane %v161, 0
  %v164 = vperm.slane %v161, 1
  %v165 = vperm.slane %v161, 2
  %v166 = vperm.slane %v161, 3
  %167 = vrot.lane.b32.xlu0 %v163, 1
  %v168 = vpop.permute.xlu0 %167
  %169 = vrot.lane.b32.xlu0 %v164, 1
  %v170 = vpop.permute.xlu0 %169
  %171 = vrot.lane.b32.xlu0 %v165, 1
  %v172 = vpop.permute.xlu0 %171
  %173 = vrot.lane.b32.xlu0 %v166, 1
  %v174 = vpop.permute.xlu0 %173
  %vm175 = vcmask 7168
  %v176 = vsel %vm175, %v168, %v170
  %v177 = vsel %vm175, %v170, %v172
  %v178 = vsel %vm175, %v172, %v174
  %v184 = vmul.f32 %v24, %v168
  %v185 = vmul.f32 %v25, %v176
  %v186 = vmul.f32 %v27, %v177
  %v187 = vmul.f32 %v28, %v178
  %v188 = vmul.f32 %v174, 0.0
  %s189 = scalar_lea.vmem %s1, 6
  %v190 = vld [vmem:[%s189] ss:$8 sm:$0xf]
  %v192 = vperm.slane %v190, 0
  %v193 = vperm.slane %v190, 1
  %v194 = vperm.slane %v190, 2
  %v195 = vperm.slane %v190, 3
  %196 = vrot.lane.b32.xlu0 %v192, 15
  %v197 = vpop.permute.xlu0 %196
  %198 = vrot.lane.b32.xlu0 %v193, 15
  %v199 = vpop.permute.xlu0 %198
  %200 = vrot.lane.b32.xlu0 %v194, 15
  %v201 = vpop.permute.xlu0 %200
  %202 = vrot.lane.b32.xlu0 %v195, 15
  %v203 = vpop.permute.xlu0 %202
  %vm204 = vcmask 121856
  %v205 = vsel %vm204, %v197, %v199
  %v206 = vsel %vm204, %v199, %v201
  %v207 = vsel %vm204, %v201, %v203
  %v213 = vmul.f32 %v24, %v197
  %v214 = vmul.f32 %v25, %v205
  %v215 = vmul.f32 %v27, %v206
  %v216 = vmul.f32 %v28, %v207
  %v217 = vmul.f32 %v203, 0.0
  %s218 = scalar_lea.vmem %s1, 7
  %v219 = vld [vmem:[%s218] ss:$8 sm:$0xf]
  %v221 = vperm.slane %v219, 0
  %v222 = vperm.slane %v219, 1
  %v223 = vperm.slane %v219, 2
  %v224 = vperm.slane %v219, 3
  %225 = vrot.lane.b32.xlu0 %v221, 16
  %v226 = vpop.permute.xlu0 %225
  %227 = vrot.lane.b32.xlu0 %v222, 16
  %v228 = vpop.permute.xlu0 %227
  %229 = vrot.lane.b32.xlu0 %v223, 16
  %v230 = vpop.permute.xlu0 %229
  %231 = vrot.lane.b32.xlu0 %v224, 16
  %v232 = vpop.permute.xlu0 %231
  %vm233 = vcmask 130048
  %v234 = vsel %vm233, %v226, %v228
  %v235 = vsel %vm233, %v228, %v230
  %v236 = vsel %vm233, %v230, %v232
  %v242 = vmul.f32 %v24, %v226
  %v243 = vmul.f32 %v25, %v234
  %v244 = vmul.f32 %v27, %v235
  %v245 = vmul.f32 %v28, %v236
  %v246 = vmul.f32 %v232, 0.0
  %s247 = scalar_lea.vmem %s1, 32
  %v248 = vld [vmem:[%s247] ss:$8 sm:$0xf]
  %v250 = vperm.slane %v248, 0
  %v251 = vperm.slane %v248, 1
  %v252 = vperm.slane %v248, 2
  %v253 = vperm.slane %v248, 3
  %254 = vrot.lane.b32.xlu0 %v250, 17
  %v255 = vpop.permute.xlu0 %254
  %256 = vrot.lane.b32.xlu0 %v251, 17
  %v257 = vpop.permute.xlu0 %256
  %258 = vrot.lane.b32.xlu0 %v252, 17
  %v259 = vpop.permute.xlu0 %258
  %260 = vrot.lane.b32.xlu0 %v253, 17
  %v261 = vpop.permute.xlu0 %260
  %vm262 = vcmask 138240
  %v263 = vsel %vm262, %v255, %v257
  %v264 = vsel %vm262, %v257, %v259
  %v265 = vsel %vm262, %v259, %v261
  %v271 = vmul.f32 %v24, %v255
  %v272 = vmul.f32 %v25, %v263
  %v273 = vmul.f32 %v27, %v264
  %v274 = vmul.f32 %v28, %v265
  %v275 = vmul.f32 %v261, 0.0
  %281 = vrot.lane.b32.xlu0 %v82, 127
  %v282 = vpop.permute.xlu0 %281
  %283 = vrot.lane.b32.xlu0 %v83, 127
  %v284 = vpop.permute.xlu0 %283
  %285 = vrot.lane.b32.xlu0 %v84, 127
  %v286 = vpop.permute.xlu0 %285
  %287 = vrot.lane.b32.xlu0 %v85, 127
  %v288 = vpop.permute.xlu0 %287
  %289 = vrot.lane.b32.xlu0 %v86, 127
  %v290 = vpop.permute.xlu0 %289
  %v291 = vsel %vm131, %v282, %v284
  %v292 = vsel %vm131, %v284, %v286
  %v293 = vsel %vm131, %v286, %v288
  %v294 = vsel %vm131, %v288, %v290
  %305 = vrot.lane.b32.xlu0 %v111, 126
  %v306 = vpop.permute.xlu0 %305
  %307 = vrot.lane.b32.xlu0 %v112, 126
  %v308 = vpop.permute.xlu0 %307
  %309 = vrot.lane.b32.xlu0 %v113, 126
  %v310 = vpop.permute.xlu0 %309
  %311 = vrot.lane.b32.xlu0 %v114, 126
  %v312 = vpop.permute.xlu0 %311
  %313 = vrot.lane.b32.xlu0 %v115, 126
  %v314 = vpop.permute.xlu0 %313
  %vm315 = vcmask 1031168
  %v316 = vsel %vm315, %v306, %v308
  %v317 = vsel %vm315, %v308, %v310
  %v318 = vsel %vm315, %v310, %v312
  %v319 = vsel %vm315, %v312, %v314
  %330 = vrot.lane.b32.xlu0 %v140, 112
  %v331 = vpop.permute.xlu0 %330
  %332 = vrot.lane.b32.xlu0 %v141, 112
  %v333 = vpop.permute.xlu0 %332
  %334 = vrot.lane.b32.xlu0 %v142, 112
  %v335 = vpop.permute.xlu0 %334
  %336 = vrot.lane.b32.xlu0 %v143, 112
  %v337 = vpop.permute.xlu0 %336
  %338 = vrot.lane.b32.xlu0 %v144, 112
  %v339 = vpop.permute.xlu0 %338
  %v340 = vsel %vm73, %v331, %v333
  %v341 = vsel %vm73, %v333, %v335
  %v342 = vsel %vm73, %v335, %v337
  %v343 = vsel %vm73, %v337, %v339
  %353 = vrot.lane.b32.xlu0 %v156, 111
  %v354 = vpop.permute.xlu0 %353
  %355 = vrot.lane.b32.xlu0 %v157, 111
  %v356 = vpop.permute.xlu0 %355
  %357 = vrot.lane.b32.xlu0 %v158, 111
  %v358 = vpop.permute.xlu0 %357
  %359 = vrot.lane.b32.xlu0 %v159, 111
  %v360 = vpop.permute.xlu0 %359
  %v361 = vsel %vm44, %v354, %v356
  %v362 = vsel %vm44, %v356, %v358
  %v363 = vsel %vm44, %v358, %v360
  %374 = vrot.lane.b32.xlu0 %v184, 110
  %v375 = vpop.permute.xlu0 %374
  %376 = vrot.lane.b32.xlu0 %v185, 110
  %v377 = vpop.permute.xlu0 %376
  %378 = vrot.lane.b32.xlu0 %v186, 110
  %v379 = vpop.permute.xlu0 %378
  %380 = vrot.lane.b32.xlu0 %v187, 110
  %v381 = vpop.permute.xlu0 %380
  %382 = vrot.lane.b32.xlu0 %v188, 110
  %v383 = vpop.permute.xlu0 %382
  %vm384 = vcmask 900096
  %v385 = vsel %vm384, %v375, %v377
  %v386 = vsel %vm384, %v377, %v379
  %v387 = vsel %vm384, %v379, %v381
  %v388 = vsel %vm384, %v381, %v383
  %399 = vrot.lane.b32.xlu0 %v213, 96
  %v400 = vpop.permute.xlu0 %399
  %401 = vrot.lane.b32.xlu0 %v214, 96
  %v402 = vpop.permute.xlu0 %401
  %403 = vrot.lane.b32.xlu0 %v215, 96
  %v404 = vpop.permute.xlu0 %403
  %405 = vrot.lane.b32.xlu0 %v216, 96
  %v406 = vpop.permute.xlu0 %405
  %407 = vrot.lane.b32.xlu0 %v217, 96
  %v408 = vpop.permute.xlu0 %407
  %vm409 = vcmask 785408
  %v410 = vsel %vm409, %v400, %v402
  %v411 = vsel %vm409, %v402, %v404
  %v412 = vsel %vm409, %v404, %v406
  %v413 = vsel %vm409, %v406, %v408
  %424 = vrot.lane.b32.xlu0 %v242, 95
  %v425 = vpop.permute.xlu0 %424
  %426 = vrot.lane.b32.xlu0 %v243, 95
  %v427 = vpop.permute.xlu0 %426
  %428 = vrot.lane.b32.xlu0 %v244, 95
  %v429 = vpop.permute.xlu0 %428
  %430 = vrot.lane.b32.xlu0 %v245, 95
  %v431 = vpop.permute.xlu0 %430
  %432 = vrot.lane.b32.xlu0 %v246, 95
  %v433 = vpop.permute.xlu0 %432
  %vm434 = vcmask 777216
  %v435 = vsel %vm434, %v425, %v427
  %v436 = vsel %vm434, %v427, %v429
  %v437 = vsel %vm434, %v429, %v431
  %v438 = vsel %vm434, %v431, %v433
  %449 = vrot.lane.b32.xlu0 %v271, 94
  %v450 = vpop.permute.xlu0 %449
  %451 = vrot.lane.b32.xlu0 %v272, 94
  %v452 = vpop.permute.xlu0 %451
  %453 = vrot.lane.b32.xlu0 %v273, 94
  %v454 = vpop.permute.xlu0 %453
  %455 = vrot.lane.b32.xlu0 %v274, 94
  %v456 = vpop.permute.xlu0 %455
  %457 = vrot.lane.b32.xlu0 %v275, 94
  %v458 = vpop.permute.xlu0 %457
  %vm459 = vcmask 769024
  %v460 = vsel %vm459, %v450, %v452
  %v461 = vsel %vm459, %v452, %v454
  %v462 = vsel %vm459, %v454, %v456
  %v463 = vsel %vm459, %v456, %v458
  %v469 = vpack.c.bf16 %v291, %v53
  %v470 = vpack.c.bf16 %v292, %v54
  %v471 = vpack.c.bf16 %v293, %v55
  %v472 = vpack.c.bf16 %v294, %v56
  %v473 = vpack.c.bf16 %v290, %v57
  %v474 = vpack.c.bf16 %v340, %v316
  %v475 = vpack.c.bf16 %v341, %v317
  %v476 = vpack.c.bf16 %v342, %v318
  %v477 = vpack.c.bf16 %v343, %v319
  %v478 = vpack.c.bf16 %v339, %v314
  %v479 = vpack.c.bf16 %v375, %v354
  %v480 = vpack.c.bf16 %v385, %v361
  %v481 = vpack.c.bf16 %v386, %v362
  %v482 = vpack.c.bf16 %v387, %v363
  %v483 = vpack.c.bf16 %v388, %v360
  %v484 = vpack.c.bf16 %v425, %v400
  %v485 = vpack.c.bf16 %v435, %v410
  %v486 = vpack.c.bf16 %v436, %v411
  %v487 = vpack.c.bf16 %v437, %v412
  %v488 = vpack.c.bf16 %v438, %v413
  %v489 = vpack.c.bf16 %v450, %v450
  %v490 = vpack.c.bf16 %v460, %v460
  %v491 = vpack.c.bf16 %v461, %v461
  %v492 = vpack.c.bf16 %v462, %v462
  %v493 = vpack.c.bf16 %v463, %v463
  %519 = vrot.lane.b32.xlu0 %v469, 17
  %v520 = vpop.permute.xlu0 %519
  %521 = vrot.lane.b32.xlu0 %v470, 17
  %v522 = vpop.permute.xlu0 %521
  %523 = vrot.lane.b32.xlu0 %v471, 17
  %v524 = vpop.permute.xlu0 %523
  %525 = vrot.lane.b32.xlu0 %v472, 17
  %v526 = vpop.permute.xlu0 %525
  %527 = vrot.lane.b32.xlu0 %v473, 17
  %v528 = vpop.permute.xlu0 %527
  %529 = vrot.lane.b32.xlu0 %v474, 17
  %v530 = vpop.permute.xlu0 %529
  %531 = vrot.lane.b32.xlu0 %v475, 17
  %v532 = vpop.permute.xlu0 %531
  %533 = vrot.lane.b32.xlu0 %v476, 17
  %v534 = vpop.permute.xlu0 %533
  %535 = vrot.lane.b32.xlu0 %v477, 17
  %v536 = vpop.permute.xlu0 %535
  %537 = vrot.lane.b32.xlu0 %v478, 17
  %v538 = vpop.permute.xlu0 %537
  %539 = vrot.lane.b32.xlu0 %v479, 17
  %v540 = vpop.permute.xlu0 %539
  %541 = vrot.lane.b32.xlu0 %v480, 17
  %v542 = vpop.permute.xlu0 %541
  %543 = vrot.lane.b32.xlu0 %v481, 17
  %v544 = vpop.permute.xlu0 %543
  %545 = vrot.lane.b32.xlu0 %v482, 17
  %v546 = vpop.permute.xlu0 %545
  %547 = vrot.lane.b32.xlu0 %v483, 17
  %v548 = vpop.permute.xlu0 %547
  %549 = vrot.lane.b32.xlu0 %v484, 17
  %v550 = vpop.permute.xlu0 %549
  %551 = vrot.lane.b32.xlu0 %v485, 17
  %v552 = vpop.permute.xlu0 %551
  %553 = vrot.lane.b32.xlu0 %v486, 17
  %v554 = vpop.permute.xlu0 %553
  %555 = vrot.lane.b32.xlu0 %v487, 17
  %v556 = vpop.permute.xlu0 %555
  %557 = vrot.lane.b32.xlu0 %v488, 17
  %v558 = vpop.permute.xlu0 %557
  %559 = vrot.lane.b32.xlu0 %v489, 17
  %v560 = vpop.permute.xlu0 %559
  %561 = vrot.lane.b32.xlu0 %v490, 17
  %v562 = vpop.permute.xlu0 %561
  %563 = vrot.lane.b32.xlu0 %v491, 17
  %v564 = vpop.permute.xlu0 %563
  %565 = vrot.lane.b32.xlu0 %v492, 17
  %v566 = vpop.permute.xlu0 %565
  %567 = vrot.lane.b32.xlu0 %v493, 17
  %v568 = vpop.permute.xlu0 %567
  %vm569 = vcmask 138240
  %v570 = vsel %vm569, %v520, %v522
  %v571 = vsel %vm569, %v522, %v524
  %v572 = vsel %vm569, %v524, %v526
  %v573 = vsel %vm569, %v526, %v528
  %v574 = vsel %vm569, %v530, %v532
  %v575 = vsel %vm569, %v532, %v534
  %v576 = vsel %vm569, %v534, %v536
  %v577 = vsel %vm569, %v536, %v538
  %v578 = vsel %vm569, %v540, %v542
  %v579 = vsel %vm569, %v542, %v544
  %v580 = vsel %vm569, %v544, %v546
  %v581 = vsel %vm569, %v546, %v548
  %v582 = vsel %vm569, %v550, %v552
  %v583 = vsel %vm569, %v552, %v554
  %v584 = vsel %vm569, %v554, %v556
  %v585 = vsel %vm569, %v556, %v558
  %v586 = vsel %vm569, %v560, %v562
  %v587 = vsel %vm569, %v562, %v564
  %v588 = vsel %vm569, %v564, %v566
  %v589 = vsel %vm569, %v566, %v568
  %vm606 = vcmask 588800
  %v608 = vsel %vm606, %v29, 0
  %vm610 = vcmask 1043456
  %v612 = vsel %vm610, %v586, 0
  %v615 = vsel %vm610, %v587, 0
  %v618 = vsel %vm610, %v588, 0
  %v621 = vsel %vm610, %v589, 0
  %623 = vmatpush.bf16.msra.mxu0 0
  %624 = vmatpush.bf16.msra.mxu0 0
  %625 = vmatpush.bf16.msra.mxu0 0
  %626 = vmatpush.bf16.msra.mxu0 %v612
  %627 = vmatpush.bf16.msra.mxu0 %v582
  %628 = vmatpush.bf16.msra.mxu0 %v578
  %629 = vmatpush.bf16.msra.mxu0 %v574
  %630 = vmatpush.bf16.msra.mxu0 %v570
  %631 = vmatmul.bf16.gmra.mxu0 %v608
  %v632 = vpop.f32.mrf.mxu0
  %v633 = vadd.f32 0.0, %v632
  %v634 = vpop.f32.mrf.mxu0
  %635 = vdwg.mxu0
  %636 = vmatpush.bf16.msra.mxu0 0
  %637 = vmatpush.bf16.msra.mxu0 0
  %638 = vmatpush.bf16.msra.mxu0 0
  %639 = vmatpush.bf16.msra.mxu0 %v615
  %640 = vmatpush.bf16.msra.mxu0 %v583
  %641 = vmatpush.bf16.msra.mxu0 %v579
  %642 = vmatpush.bf16.msra.mxu0 %v575
  %643 = vmatpush.bf16.msra.mxu0 %v571
  %644 = vmatmul.bf16.gmra.mxu0 %v608
  %v645 = vpop.f32.mrf.mxu0
  %v646 = vadd.f32 0.0, %v645
  %v647 = vpop.f32.mrf.mxu0
  %648 = vdwg.mxu0
  %649 = vmatpush.bf16.msra.mxu0 0
  %650 = vmatpush.bf16.msra.mxu0 0
  %651 = vmatpush.bf16.msra.mxu0 0
  %652 = vmatpush.bf16.msra.mxu0 %v618
  %653 = vmatpush.bf16.msra.mxu0 %v584
  %654 = vmatpush.bf16.msra.mxu0 %v580
  %655 = vmatpush.bf16.msra.mxu0 %v576
  %656 = vmatpush.bf16.msra.mxu0 %v572
  %657 = vmatmul.bf16.gmra.mxu0 %v608
  %v658 = vpop.f32.mrf.mxu0
  %v659 = vadd.f32 0.0, %v658
  %v660 = vpop.f32.mrf.mxu0
  %661 = vdwg.mxu0
  %662 = vmatpush.bf16.msra.mxu0 0
  %663 = vmatpush.bf16.msra.mxu0 0
  %664 = vmatpush.bf16.msra.mxu0 0
  %665 = vmatpush.bf16.msra.mxu0 %v621
  %666 = vmatpush.bf16.msra.mxu0 %v585
  %667 = vmatpush.bf16.msra.mxu0 %v581
  %668 = vmatpush.bf16.msra.mxu0 %v577
  %669 = vmatpush.bf16.msra.mxu0 %v573
  %670 = vmatmul.bf16.gmra.mxu0 %v608
  %v671 = vpop.f32.mrf.mxu0
  %v672 = vadd.f32 0.0, %v671
  %v673 = vpop.f32.mrf.mxu0
  %674 = vdwg.mxu0
  %v675 = vadd.f32 %v633, %v646
  %v676 = vadd.f32 %v675, %v659
  %v677 = vadd.f32 %v676, %v672
  %678 = vadd.xlane.f32.xlu0 %v677
  %v679 = vpop.xlane.xlu0 %678
  %v680 = vmul.f32 %v679, 0.001953125
  %v681 = vsub.f32 %v633, %v680
  %v682 = vsub.f32 %v646, %v680
  %v683 = vsub.f32 %v659, %v680
  %v684 = vsub.f32 %v672, %v680
  %v685 = vmul.f32 %v681, %v681
  %v686 = vmul.f32 %v682, %v682
  %v687 = vmul.f32 %v683, %v683
  %v688 = vmul.f32 %v684, %v684
  %v689 = vadd.f32 %v685, %v686
  %v690 = vadd.f32 %v689, %v687
  %v691 = vadd.f32 %v690, %v688
  %692 = vadd.xlane.f32.xlu0 %v691
  %v693 = vpop.xlane.xlu0 %692
  %v694 = vmul.f32 %v693, 0.001953125
  %v695 = vld [vmem:[%s4] sm:$0xff]
  %v696 = vadd.f32 %v694, 1e-05
  %v697 = vrsqrt.pop %v696
  %v698 = vmul.f32 %v697, %v696
  %v699 = vmul.f32 %v698, %v697
  %v700 = vmul.f32 0.5, %v699
  %v701 = vsub.f32 1.5, %v700
  %v702 = vmul.f32 %v697, %v701
  %vm703 = vweird.f32 %v696
  %vm704 = vweird.f32 %v697
  %vm705 = vmor %vm703, %vm704
  %v706 = vsel %vm705, %v697, %v702
  %v707 = vmul.f32 %v695, %v706
  %709 = vset.pattern.permute.xlu0 0
  %710 = vperm.xlu0 %709, %v707
  %v711 = vpop.permute.xlu0 %710
  %v713 = vmul.f32 %v681, %v711
  %v714 = vmul.f32 %v682, %v711
  %v715 = vmul.f32 %v683, %v711
  %v716 = vmul.f32 %v684, %v711
  %v717 = vld [vmem:[%s5] sm:$0xff]
  %719 = vset.pattern.permute.xlu0 0
  %720 = vperm.xlu0 %719, %v717
  %v721 = vpop.permute.xlu0 %720
  %v723 = vadd.f32 %v713, %v721
  %v724 = vadd.f32 %v714, %v721
  %v725 = vadd.f32 %v715, %v721
  %v726 = vadd.f32 %v716, %v721
  %v727 = vmax.f32 %v723, 0.0
  %v728 = vmax.f32 %v724, 0.0
  %v729 = vmax.f32 %v725, 0.0
  %v730 = vmax.f32 %v726, 0.0
  %v731 = vld [vmem:[%s3] sm:$0xf]
  %v732 = vmul.f32 %v727, %v45
  %v733 = vmul.f32 %v728, %v46
  %v734 = vmul.f32 %v729, %v47
  %v735 = vmul.f32 %v730, %v43
  %v736 = vmul.f32 %v727, %v74
  %v737 = vmul.f32 %v728, %v75
  %v738 = vmul.f32 %v729, %v76
  %v739 = vmul.f32 %v730, %v72
  %v740 = vmul.f32 %v727, %v103
  %v741 = vmul.f32 %v728, %v104
  %v742 = vmul.f32 %v729, %v105
  %v743 = vmul.f32 %v730, %v101
  %v744 = vmul.f32 %v727, %v132
  %v745 = vmul.f32 %v728, %v133
  %v746 = vmul.f32 %v729, %v134
  %v747 = vmul.f32 %v730, %v130
  %v748 = vmul.f32 %v727, %v148
  %v749 = vmul.f32 %v728, %v149
  %v750 = vmul.f32 %v729, %v150
  %v751 = vmul.f32 %v730, %v151
  %v752 = vmul.f32 %v727, %v168
  %v753 = vmul.f32 %v728, %v176
  %v754 = vmul.f32 %v729, %v177
  %v755 = vmul.f32 %v730, %v178
  %v756 = vmul.f32 %v727, %v197
  %v757 = vmul.f32 %v728, %v205
  %v758 = vmul.f32 %v729, %v206
  %v759 = vmul.f32 %v730, %v207
  %v760 = vmul.f32 %v727, %v226
  %v761 = vmul.f32 %v728, %v234
  %v762 = vmul.f32 %v729, %v235
  %v763 = vmul.f32 %v730, %v236
  %v764 = vmul.f32 %v727, %v255
  %v765 = vmul.f32 %v728, %v263
  %v766 = vmul.f32 %v729, %v264
  %v767 = vmul.f32 %v730, %v265
  %772 = vrot.lane.b32.xlu0 %v736, 127
  %v773 = vpop.permute.xlu0 %772
  %774 = vrot.lane.b32.xlu0 %v737, 127
  %v775 = vpop.permute.xlu0 %774
  %776 = vrot.lane.b32.xlu0 %v738, 127
  %v777 = vpop.permute.xlu0 %776
  %778 = vrot.lane.b32.xlu0 %v739, 127
  %v779 = vpop.permute.xlu0 %778
  %v780 = vsel %vm131, %v282, %v773
  %v781 = vsel %vm131, %v773, %v775
  %v782 = vsel %vm131, %v775, %v777
  %v783 = vsel %vm131, %v777, %v779
  %793 = vrot.lane.b32.xlu0 %v740, 126
  %v794 = vpop.permute.xlu0 %793
  %795 = vrot.lane.b32.xlu0 %v741, 126
  %v796 = vpop.permute.xlu0 %795
  %797 = vrot.lane.b32.xlu0 %v742, 126
  %v798 = vpop.permute.xlu0 %797
  %799 = vrot.lane.b32.xlu0 %v743, 126
  %v800 = vpop.permute.xlu0 %799
  %v801 = vsel %vm315, %v306, %v794
  %v802 = vsel %vm315, %v794, %v796
  %v803 = vsel %vm315, %v796, %v798
  %v804 = vsel %vm315, %v798, %v800
  %814 = vrot.lane.b32.xlu0 %v744, 112
  %v815 = vpop.permute.xlu0 %814
  %816 = vrot.lane.b32.xlu0 %v745, 112
  %v817 = vpop.permute.xlu0 %816
  %818 = vrot.lane.b32.xlu0 %v746, 112
  %v819 = vpop.permute.xlu0 %818
  %820 = vrot.lane.b32.xlu0 %v747, 112
  %v821 = vpop.permute.xlu0 %820
  %v822 = vsel %vm73, %v331, %v815
  %v823 = vsel %vm73, %v815, %v817
  %v824 = vsel %vm73, %v817, %v819
  %v825 = vsel %vm73, %v819, %v821
  %835 = vrot.lane.b32.xlu0 %v748, 111
  %v836 = vpop.permute.xlu0 %835
  %837 = vrot.lane.b32.xlu0 %v749, 111
  %v838 = vpop.permute.xlu0 %837
  %839 = vrot.lane.b32.xlu0 %v750, 111
  %v840 = vpop.permute.xlu0 %839
  %841 = vrot.lane.b32.xlu0 %v751, 111
  %v842 = vpop.permute.xlu0 %841
  %v843 = vsel %vm44, %v836, %v838
  %v844 = vsel %vm44, %v838, %v840
  %v845 = vsel %vm44, %v840, %v842
  %855 = vrot.lane.b32.xlu0 %v752, 110
  %v856 = vpop.permute.xlu0 %855
  %857 = vrot.lane.b32.xlu0 %v753, 110
  %v858 = vpop.permute.xlu0 %857
  %859 = vrot.lane.b32.xlu0 %v754, 110
  %v860 = vpop.permute.xlu0 %859
  %861 = vrot.lane.b32.xlu0 %v755, 110
  %v862 = vpop.permute.xlu0 %861
  %v863 = vsel %vm384, %v856, %v858
  %v864 = vsel %vm384, %v858, %v860
  %v865 = vsel %vm384, %v860, %v862
  %v866 = vsel %vm384, %v862, %v383
  %876 = vrot.lane.b32.xlu0 %v756, 96
  %v877 = vpop.permute.xlu0 %876
  %878 = vrot.lane.b32.xlu0 %v757, 96
  %v879 = vpop.permute.xlu0 %878
  %880 = vrot.lane.b32.xlu0 %v758, 96
  %v881 = vpop.permute.xlu0 %880
  %882 = vrot.lane.b32.xlu0 %v759, 96
  %v883 = vpop.permute.xlu0 %882
  %v884 = vsel %vm409, %v877, %v879
  %v885 = vsel %vm409, %v879, %v881
  %v886 = vsel %vm409, %v881, %v883
  %v887 = vsel %vm409, %v883, %v408
  %897 = vrot.lane.b32.xlu0 %v760, 95
  %v898 = vpop.permute.xlu0 %897
  %899 = vrot.lane.b32.xlu0 %v761, 95
  %v900 = vpop.permute.xlu0 %899
  %901 = vrot.lane.b32.xlu0 %v762, 95
  %v902 = vpop.permute.xlu0 %901
  %903 = vrot.lane.b32.xlu0 %v763, 95
  %v904 = vpop.permute.xlu0 %903
  %v905 = vsel %vm434, %v898, %v900
  %v906 = vsel %vm434, %v900, %v902
  %v907 = vsel %vm434, %v902, %v904
  %v908 = vsel %vm434, %v904, %v433
  %918 = vrot.lane.b32.xlu0 %v764, 94
  %v919 = vpop.permute.xlu0 %918
  %920 = vrot.lane.b32.xlu0 %v765, 94
  %v921 = vpop.permute.xlu0 %920
  %922 = vrot.lane.b32.xlu0 %v766, 94
  %v923 = vpop.permute.xlu0 %922
  %924 = vrot.lane.b32.xlu0 %v767, 94
  %v925 = vpop.permute.xlu0 %924
  %v926 = vsel %vm459, %v919, %v921
  %v927 = vsel %vm459, %v921, %v923
  %v928 = vsel %vm459, %v923, %v925
  %v929 = vsel %vm459, %v925, %v458
  %v935 = vpack.c.bf16 %v780, %v53
  %v936 = vpack.c.bf16 %v781, %v732
  %v937 = vpack.c.bf16 %v782, %v733
  %v938 = vpack.c.bf16 %v783, %v734
  %v939 = vpack.c.bf16 %v779, %v735
  %v940 = vpack.c.bf16 %v822, %v801
  %v941 = vpack.c.bf16 %v823, %v802
  %v942 = vpack.c.bf16 %v824, %v803
  %v943 = vpack.c.bf16 %v825, %v804
  %v944 = vpack.c.bf16 %v821, %v800
  %v945 = vpack.c.bf16 %v856, %v836
  %v946 = vpack.c.bf16 %v863, %v843
  %v947 = vpack.c.bf16 %v864, %v844
  %v948 = vpack.c.bf16 %v865, %v845
  %v949 = vpack.c.bf16 %v866, %v842
  %v950 = vpack.c.bf16 %v898, %v877
  %v951 = vpack.c.bf16 %v905, %v884
  %v952 = vpack.c.bf16 %v906, %v885
  %v953 = vpack.c.bf16 %v907, %v886
  %v954 = vpack.c.bf16 %v908, %v887
  %v955 = vpack.c.bf16 %v919, %v919
  %v956 = vpack.c.bf16 %v926, %v926
  %v957 = vpack.c.bf16 %v927, %v927
  %v958 = vpack.c.bf16 %v928, %v928
  %v959 = vpack.c.bf16 %v929, %v929
  %985 = vrot.lane.b32.xlu0 %v935, 17
  %v986 = vpop.permute.xlu0 %985
  %987 = vrot.lane.b32.xlu0 %v936, 17
  %v988 = vpop.permute.xlu0 %987
  %989 = vrot.lane.b32.xlu0 %v937, 17
  %v990 = vpop.permute.xlu0 %989
  %991 = vrot.lane.b32.xlu0 %v938, 17
  %v992 = vpop.permute.xlu0 %991
  %993 = vrot.lane.b32.xlu0 %v939, 17
  %v994 = vpop.permute.xlu0 %993
  %995 = vrot.lane.b32.xlu0 %v940, 17
  %v996 = vpop.permute.xlu0 %995
  %997 = vrot.lane.b32.xlu0 %v941, 17
  %v998 = vpop.permute.xlu0 %997
  %999 = vrot.lane.b32.xlu0 %v942, 17
  %v1000 = vpop.permute.xlu0 %999
  %1001 = vrot.lane.b32.xlu0 %v943, 17
  %v1002 = vpop.permute.xlu0 %1001
  %1003 = vrot.lane.b32.xlu0 %v944, 17
  %v1004 = vpop.permute.xlu0 %1003
  %1005 = vrot.lane.b32.xlu0 %v945, 17
  %v1006 = vpop.permute.xlu0 %1005
  %1007 = vrot.lane.b32.xlu0 %v946, 17
  %v1008 = vpop.permute.xlu0 %1007
  %1009 = vrot.lane.b32.xlu0 %v947, 17
  %v1010 = vpop.permute.xlu0 %1009
  %1011 = vrot.lane.b32.xlu0 %v948, 17
  %v1012 = vpop.permute.xlu0 %1011
  %1013 = vrot.lane.b32.xlu0 %v949, 17
  %v1014 = vpop.permute.xlu0 %1013
  %1015 = vrot.lane.b32.xlu0 %v950, 17
  %v1016 = vpop.permute.xlu0 %1015
  %1017 = vrot.lane.b32.xlu0 %v951, 17
  %v1018 = vpop.permute.xlu0 %1017
  %1019 = vrot.lane.b32.xlu0 %v952, 17
  %v1020 = vpop.permute.xlu0 %1019
  %1021 = vrot.lane.b32.xlu0 %v953, 17
  %v1022 = vpop.permute.xlu0 %1021
  %1023 = vrot.lane.b32.xlu0 %v954, 17
  %v1024 = vpop.permute.xlu0 %1023
  %1025 = vrot.lane.b32.xlu0 %v955, 17
  %v1026 = vpop.permute.xlu0 %1025
  %1027 = vrot.lane.b32.xlu0 %v956, 17
  %v1028 = vpop.permute.xlu0 %1027
  %1029 = vrot.lane.b32.xlu0 %v957, 17
  %v1030 = vpop.permute.xlu0 %1029
  %1031 = vrot.lane.b32.xlu0 %v958, 17
  %v1032 = vpop.permute.xlu0 %1031
  %1033 = vrot.lane.b32.xlu0 %v959, 17
  %v1034 = vpop.permute.xlu0 %1033
  %v1035 = vsel %vm569, %v986, %v988
  %v1036 = vsel %vm569, %v988, %v990
  %v1037 = vsel %vm569, %v990, %v992
  %v1038 = vsel %vm569, %v992, %v994
  %v1039 = vsel %vm569, %v996, %v998
  %v1040 = vsel %vm569, %v998, %v1000
  %v1041 = vsel %vm569, %v1000, %v1002
  %v1042 = vsel %vm569, %v1002, %v1004
  %v1043 = vsel %vm569, %v1006, %v1008
  %v1044 = vsel %vm569, %v1008, %v1010
  %v1045 = vsel %vm569, %v1010, %v1012
  %v1046 = vsel %vm569, %v1012, %v1014
  %v1047 = vsel %vm569, %v1016, %v1018
  %v1048 = vsel %vm569, %v1018, %v1020
  %v1049 = vsel %vm569, %v1020, %v1022
  %v1050 = vsel %vm569, %v1022, %v1024
  %v1051 = vsel %vm569, %v1026, %v1028
  %v1052 = vsel %vm569, %v1028, %v1030
  %v1053 = vsel %vm569, %v1030, %v1032
  %v1054 = vsel %vm569, %v1032, %v1034
  %v1072 = vsel %vm606, %v731, 0
  %v1075 = vsel %vm610, %v1051, 0
  %v1078 = vsel %vm610, %v1052, 0
  %v1081 = vsel %vm610, %v1053, 0
  %v1084 = vsel %vm610, %v1054, 0
  %1086 = vmatpush.bf16.msra.mxu0 0
  %1087 = vmatpush.bf16.msra.mxu0 0
  %1088 = vmatpush.bf16.msra.mxu0 0
  %1089 = vmatpush.bf16.msra.mxu0 %v1075
  %1090 = vmatpush.bf16.msra.mxu0 %v1047
  %1091 = vmatpush.bf16.msra.mxu0 %v1043
  %1092 = vmatpush.bf16.msra.mxu0 %v1039
  %1093 = vmatpush.bf16.msra.mxu0 %v1035
  %1094 = vmatmul.bf16.gmra.mxu0 %v1072
  %v1095 = vpop.f32.mrf.mxu0
  %v1096 = vadd.f32 0.0, %v1095
  %v1097 = vpop.f32.mrf.mxu0
  %1098 = vdwg.mxu0
  %1099 = vmatpush.bf16.msra.mxu0 0
  %1100 = vmatpush.bf16.msra.mxu0 0
  %1101 = vmatpush.bf16.msra.mxu0 0
  %1102 = vmatpush.bf16.msra.mxu0 %v1078
  %1103 = vmatpush.bf16.msra.mxu0 %v1048
  %1104 = vmatpush.bf16.msra.mxu0 %v1044
  %1105 = vmatpush.bf16.msra.mxu0 %v1040
  %1106 = vmatpush.bf16.msra.mxu0 %v1036
  %1107 = vmatmul.bf16.gmra.mxu0 %v1072
  %v1108 = vpop.f32.mrf.mxu0
  %v1109 = vadd.f32 0.0, %v1108
  %v1110 = vpop.f32.mrf.mxu0
  %1111 = vdwg.mxu0
  %1112 = vmatpush.bf16.msra.mxu0 0
  %1113 = vmatpush.bf16.msra.mxu0 0
  %1114 = vmatpush.bf16.msra.mxu0 0
  %1115 = vmatpush.bf16.msra.mxu0 %v1081
  %1116 = vmatpush.bf16.msra.mxu0 %v1049
  %1117 = vmatpush.bf16.msra.mxu0 %v1045
  %1118 = vmatpush.bf16.msra.mxu0 %v1041
  %1119 = vmatpush.bf16.msra.mxu0 %v1037
  %1120 = vmatmul.bf16.gmra.mxu0 %v1072
  %v1121 = vpop.f32.mrf.mxu0
  %v1122 = vadd.f32 0.0, %v1121
  %v1123 = vpop.f32.mrf.mxu0
  %1124 = vdwg.mxu0
  %1125 = vmatpush.bf16.msra.mxu0 0
  %1126 = vmatpush.bf16.msra.mxu0 0
  %1127 = vmatpush.bf16.msra.mxu0 0
  %1128 = vmatpush.bf16.msra.mxu0 %v1084
  %1129 = vmatpush.bf16.msra.mxu0 %v1050
  %1130 = vmatpush.bf16.msra.mxu0 %v1046
  %1131 = vmatpush.bf16.msra.mxu0 %v1042
  %1132 = vmatpush.bf16.msra.mxu0 %v1038
  %1133 = vmatmul.bf16.gmra.mxu0 %v1072
  %v1134 = vpop.f32.mrf.mxu0
  %v1135 = vadd.f32 0.0, %v1134
  %v1136 = vpop.f32.mrf.mxu0
  %1137 = vdwg.mxu0
  %v1140 = vrot.slane %v1109, 4
  %v1141 = vsel %vm610, %v1096, %v1140
  %1143 = vst [vmem:[%s6] sm:$0xff] %v1141
  %v1146 = vrot.slane %v1135, 4
  %v1147 = vsel %vm610, %v1122, %v1146
  %s1149 = scalar_lea.vmem %s6, 8
  %1150 = vst [vmem:[%s1149] sm:$0xff] %v1147
  // Predicated region
  $region26: #{output_cv_block.1} parent=0 // pred_check
    _
  $region27: #{output_cv_block.1} parent=0 // pred_check_branch
    %1152 = sbr.rel (0) target = $region29
  $region28: #{output_cv_block.1} parent=0 // pred_region
    _
  $region29: #{output_cv_block.1} parent=0 // pred_fallthru
    _
  // Predicated region
  $region30: #{output_cv_block.1} parent=0 // pred_check
    _
  $region31: #{output_cv_block.1} parent=0 // pred_check_branch
    %1154 = sbr.rel (0) target = $region33
  $region32: #{output_cv_block.1} parent=0 // pred_region
    _
  $region33: #{output_cv_block.1} parent=0 // pred_fallthru
    _

</llo_original>
